<compile_context>
chip_gen: v7x
topology: tpu7x:2x2x1
jax: 0.10.0
libtpu: 0.0.40
codegen_flags: <defaults>
</compile_context>

<pallas_src>
import functools

import jax
import jax.numpy as jnp
from jax.experimental import pallas as pl
from jax.experimental.pallas import tpu as pltpu


def _mlp_kernel(x_ref, w1_ref, b1_ref, w2_ref, b2_ref, o_ref):
    # fc1: (TB, D) @ (D, H) + (1, H), f32 accumulation on the MXU.
    h = jnp.dot(x_ref[...], w1_ref[...], preferred_element_type=jnp.float32)
    # ReLU epilogue in f32 (VPU work hidden under the dominant x DMA).
    h = jnp.maximum(h + b1_ref[...], 0.0)
    # fc2: (TB, H) @ (H, O) + (1, O) -- single MXU pass despite the tiny N.
    out = jnp.dot(h, w2_ref[...], preferred_element_type=jnp.float32)
    o_ref[...] = (out + b2_ref[...]).astype(o_ref.dtype)


def _round_up(n, m):
    return ((n + m - 1) // m) * m


@functools.partial(jax.jit, static_argnames=("block_batch",))
def simple_nn_forward(x, w1, b1, w2, b2, *, block_batch: int = 1024):
    """Fused SimpleNN forward (fc1 -> ReLU -> fc2) on TPU via Pallas.

    x:  (B, D)  float32
    w1: (D, 128), b1: (1, 128)
    w2: (128, 2), b2: (1, 2)
    returns (B, 2) float32
    """
    B, D = x.shape
    H = w1.shape[1]
    O = w2.shape[1]

    # Batch tile: multiple of 8 (f32 sublane), capped by the requested block
    # size and by the (rounded-up) batch so tiny batches don't over-allocate.
    tb = min(block_batch, _round_up(B, 8))
    tb = max(8, _round_up(tb, 8))
    num_blocks = pl.cdiv(B, tb)

    # Advisory cost hint for XLA's scheduler around the custom call.
    cost = pl.CostEstimate(
        flops=2 * B * D * H + 2 * B * H * O,
        transcendentals=0,
        bytes_accessed=4 * (B * D + D * H + H + H * O + O + B * O),
    )

    out = pl.pallas_call(
        _mlp_kernel,
        out_shape=jax.ShapeDtypeStruct((B, O), jnp.float32),
        grid=(num_blocks,),
        in_specs=[
            pl.BlockSpec((tb, D), lambda i: (i, 0)),   # x: tiled over batch
            pl.BlockSpec((D, H), lambda i: (0, 0)),    # w1: resident
            pl.BlockSpec((1, H), lambda i: (0, 0)),    # b1: resident
            pl.BlockSpec((H, O), lambda i: (0, 0)),    # w2: resident
            pl.BlockSpec((1, O), lambda i: (0, 0)),    # b2: resident
        ],
        out_specs=pl.BlockSpec((tb, O), lambda i: (i, 0)),
        compiler_params=pltpu.CompilerParams(
            # Batch steps are independent -> shard across TCs on v7x.
            dimension_semantics=("parallel",),
        ),
        cost_estimate=cost,
    )(x, w1, b1, w2, b2)

    return out


def init_params(key, input_size, hidden=128, out=2):
    """Deterministic synthetic parameters (PyTorch-Linear-like uniform init)."""
    k1, k2, k3, k4 = jax.random.split(key, 4)
    bound1 = 1.0 / jnp.sqrt(input_size)
    bound2 = 1.0 / jnp.sqrt(hidden)
    # Stored as [in, out] (transposed vs. PyTorch's [out, in]).
    w1 = jax.random.uniform(k1, (input_size, hidden), jnp.float32, -bound1, bound1)
    b1 = jax.random.uniform(k2, (1, hidden), jnp.float32, -bound1, bound1)
    w2 = jax.random.uniform(k3, (hidden, out), jnp.float32, -bound2, bound2)
    b2 = jax.random.uniform(k4, (1, out), jnp.float32, -bound2, bound2)
    return w1, b1, w2, b2


if __name__ == "__main__":
    key = jax.random.PRNGKey(0)
    k_x, k_p = jax.random.split(key)

    # Small shapes consistent with a tabular churn model, but big enough to
    # exercise batch tiling + the ragged last block (250 rows, 64-row tiles ->
    # 4 grid steps, 6 masked rows in the final block).
    batch = 250
    input_size = 32

    x = jax.random.normal(k_x, (batch, input_size), jnp.float32)
    w1, b1, w2, b2 = init_params(k_p, input_size)

    out = simple_nn_forward(x, w1, b1, w2, b2, block_batch=64)
    out = jax.block_until_ready(out)

    # Reference check in plain JAX (same math as the PyTorch module).
    ref = jnp.maximum(x @ w1 + b1, 0.0) @ w2 + b2
    assert out.shape == (batch, 2), out.shape
    assert jnp.allclose(out, ref, atol=3e-5, rtol=3e-5), "mismatch vs reference"

    print("KERNEL_OK")
</pallas_src>

<mosaic_0001>
module attributes {stable_mosaic.version = 11 : i64} {
  func.func @_mlp_kernel(%arg0: i32, %arg1: memref<64x32xf32, #tpu.memory_space<vmem>>, %arg2: memref<32x128xf32, #tpu.memory_space<vmem>>, %arg3: memref<1x128xf32, #tpu.memory_space<vmem>>, %arg4: memref<128x2xf32, #tpu.memory_space<vmem>>, %arg5: memref<1x2xf32, #tpu.memory_space<vmem>>, %arg6: memref<64x2xf32, #tpu.memory_space<vmem>>) attributes {dimension_semantics = [#tpu.dimension_semantics<parallel>], iteration_bounds = array<i64: 4>, scalar_prefetch = 0 : i64, scratch_operands = 0 : i64, tpu.core_type = #tpu.core_type<tc>, window_params = [{transform_indices = @transform_0, window_bounds = array<i64: 64, 32>}, {pipeline_mode = #tpu.pipeline_mode<synchronous>, transform_indices = @transform_1, window_bounds = array<i64: 32, 128>}, {pipeline_mode = #tpu.pipeline_mode<synchronous>, transform_indices = @transform_2, window_bounds = array<i64: 1, 128>}, {pipeline_mode = #tpu.pipeline_mode<synchronous>, transform_indices = @transform_3, window_bounds = array<i64: 128, 2>}, {pipeline_mode = #tpu.pipeline_mode<synchronous>, transform_indices = @transform_4, window_bounds = array<i64: 1, 2>}, {transform_indices = @transform_5, window_bounds = array<i64: 64, 2>}]} {
    %c0 = arith.constant 0 : index
    %c0_0 = arith.constant 0 : index
    %0 = vector.load %arg1[%c0, %c0_0] : memref<64x32xf32, #tpu.memory_space<vmem>>, vector<64x32xf32>
    %c0_1 = arith.constant 0 : index
    %c0_2 = arith.constant 0 : index
    %1 = vector.load %arg2[%c0_1, %c0_2] : memref<32x128xf32, #tpu.memory_space<vmem>>, vector<32x128xf32>
    %cst = arith.constant dense<0.000000e+00> : vector<64x128xf32>
    %2 = tpu.matmul %0, %1, %cst {dimension_numbers = #tpu.dot_dimension_numbers<[1], [0], [0], [1], [0, 0, 1, 1], [], []>} : vector<64x32xf32>, vector<32x128xf32>, vector<64x128xf32> -> vector<64x128xf32>
    %c0_3 = arith.constant 0 : index
    %c0_4 = arith.constant 0 : index
    %3 = vector.load %arg3[%c0_3, %c0_4] : memref<1x128xf32, #tpu.memory_space<vmem>>, vector<1x128xf32>
    %4 = vector.broadcast %3 : vector<1x128xf32> to vector<64x128xf32>
    %5 = arith.addf %2, %4 : vector<64x128xf32>
    %cst_5 = arith.constant 0.000000e+00 : f32
    %6 = vector.broadcast %cst_5 : f32 to vector<64x128xf32>
    %7 = arith.maximumf %5, %6 : vector<64x128xf32>
    %c0_6 = arith.constant 0 : index
    %c0_7 = arith.constant 0 : index
    %8 = vector.load %arg4[%c0_6, %c0_7] : memref<128x2xf32, #tpu.memory_space<vmem>>, vector<128x2xf32>
    %cst_8 = arith.constant dense<0.000000e+00> : vector<64x2xf32>
    %9 = tpu.matmul %7, %8, %cst_8 {dimension_numbers = #tpu.dot_dimension_numbers<[1], [0], [0], [1], [0, 0, 1, 1], [], []>} : vector<64x128xf32>, vector<128x2xf32>, vector<64x2xf32> -> vector<64x2xf32>
    %c0_9 = arith.constant 0 : index
    %c0_10 = arith.constant 0 : index
    %10 = vector.load %arg5[%c0_9, %c0_10] : memref<1x2xf32, #tpu.memory_space<vmem>>, vector<1x2xf32>
    %11 = vector.broadcast %10 : vector<1x2xf32> to vector<64x2xf32>
    %12 = arith.addf %9, %11 : vector<64x2xf32>
    %c0_11 = arith.constant 0 : index
    %c0_12 = arith.constant 0 : index
    %13 = vector.load %arg6[%c0_11, %c0_12] : memref<64x2xf32, #tpu.memory_space<vmem>>, vector<64x2xf32>
    tpu.vector_store %arg6[%c0_11, %c0_12], %12 {strides = array<i32>} : memref<64x2xf32, #tpu.memory_space<vmem>>, vector<64x2xf32>,
    return
  }
  func.func @transform_0(%arg0: i32) -> (i32, i32) {
    %c0_i32 = arith.constant 0 : i32
    %c0_i32_0 = arith.constant 0 : i32
    return %arg0, %c0_i32 : i32, i32
  }
  func.func @transform_1(%arg0: i32) -> (i32, i32) {
    %c0_i32 = arith.constant 0 : i32
    %c0_i32_0 = arith.constant 0 : i32
    %c0_i32_1 = arith.constant 0 : i32
    return %c0_i32, %c0_i32_0 : i32, i32
  }
  func.func @transform_2(%arg0: i32) -> (i32, i32) {
    %c0_i32 = arith.constant 0 : i32
    %c0_i32_0 = arith.constant 0 : i32
    %c0_i32_1 = arith.constant 0 : i32
    return %c0_i32, %c0_i32_0 : i32, i32
  }
  func.func @transform_3(%arg0: i32) -> (i32, i32) {
    %c0_i32 = arith.constant 0 : i32
    %c0_i32_0 = arith.constant 0 : i32
    %c0_i32_1 = arith.constant 0 : i32
    return %c0_i32, %c0_i32_0 : i32, i32
  }
  func.func @transform_4(%arg0: i32) -> (i32, i32) {
    %c0_i32 = arith.constant 0 : i32
    %c0_i32_0 = arith.constant 0 : i32
    %c0_i32_1 = arith.constant 0 : i32
    return %c0_i32, %c0_i32_0 : i32, i32
  }
  func.func @transform_5(%arg0: i32) -> (i32, i32) {
    %c0_i32 = arith.constant 0 : i32
    %c0_i32_0 = arith.constant 0 : i32
    return %arg0, %c0_i32 : i32, i32
  }
}

</mosaic_0001>

<llo_original>
// kernel: simple_nn_forward.1
$region0: #{simple_nn_forward.1}
  #allocation0 [shape = 'u32[]', space=smem, size = 0x4, offset = 0x4, fixed_abs, tag = 'smem constant byte address 0x4 - core index']
  #allocation1 [shape = 'u32[144,128]{1,0:T(1,128)}', space=vmem, size = 0x12000, scoped, tag = 'internal scratch']
  %s0 = inlined_call_operand.vmem [shape: f32[250,32], index: 0, kind: input, shape index: {}]
  %s1 = inlined_call_operand.vmem [shape: f32[32,128], index: 1, kind: input, shape index: {}]
  %s2 = inlined_call_operand.vmem [shape: f32[1,128], index: 2, kind: input, shape index: {}]
  %s3 = inlined_call_operand.vmem [shape: f32[128,2], index: 3, kind: input, shape index: {}]
  %s4 = inlined_call_operand.vmem [shape: f32[1,2], index: 4, kind: input, shape index: {}]
  %s5 = inlined_call_operand.vmem [shape: f32[250,2], index: 5, kind: output, shape index: {}]
  %s6 = sld [smem:[#allocation0]]
  $region53: #{simple_nn_forward.1} parent=0
    _
  %s8 = ssub.s32 1, %s6
  %s9 = scalar_select 0, %s8, %s6
  loop: start=0, step=1, limit=6
  $region2: #{simple_nn_forward.1} parent=0 // loop_pre_header
    _
  $region3: #{simple_nn_forward.1} parent=0 // loop_header
    %s11 = sphi 0, %s15
    %p12 = scmp.ge.s32.totalorder %s11, 6
    %s21 = sphi 0, %s23
    %s24 = sphi 0, %s21
    %s25 = sphi 0, %s24
    %s41 = sphi 0, %s25
    %s45 = sphi 0, %s45
    %s47 = sphi 0, %s45
    %s48 = sphi 0, %s47
    %s62 = sphi 0, %s48
    %s66 = sphi 0, %s66
    %s68 = sphi 0, %s66
    %s69 = sphi 0, %s68
    %s83 = sphi 0, %s69
    %s87 = sphi 0, %s87
    %s89 = sphi 0, %s87
    %s90 = sphi 0, %s89
    %s104 = sphi 0, %s90
    %s108 = sphi 0, %s108
    %s110 = sphi 0, %s108
    %s111 = sphi 0, %s110
    %s125 = sphi 0, %s111
    %s131 = sphi 0, %s133
    %s134 = sphi 0, %s131
    %s135 = sphi 0, %s134
    %s151 = sphi 0, %s135
  $region4: #{simple_nn_forward.1} parent=0 // loop_header_branch
    %14 = sbr.rel (%p12) target = $region8
  $region5: #{simple_nn_forward.1} parent=0 // loop_body
    %s16 = ssub.s32 %s11, 1
    %s17 = ssub.s32 %s11, 2
    %s18 = sadd.s32 %s11, 1
    %s19 = ssub.s32 %s11, %s18
    %p20 = scmp.eq.s32.totalorder %s19, 0
    %s22 = sadd.s32 %s21, 1
    %s23 = scalar_select %p20, %s21, %s22
    %p26 = pneg %p20
    %p27 = scmp.eq.s32.totalorder %s11, 3
    %p28 = por %p26, %p27
    %p29 = scmp.ne.s32.totalorder %s21, %s24
    %p30 = scmp.eq.s32.totalorder %s11, 0
    %p31 = por %p29, %p30
    %p32 = scmp.ne.s32.totalorder %s21, %s24
    %p33 = scmp.eq.s32.totalorder %s16, 3
    %p34 = por %p32, %p33
    %p35 = scmp.ne.s32.totalorder %s24, %s25
    %p36 = scmp.eq.s32.totalorder %s16, 0
    %p37 = por %p35, %p36
    %p38 = scmp.ne.s32.totalorder %s24, %s25
    %p39 = scmp.eq.s32.totalorder %s17, 3
    %p40 = por %p38, %p39
    %p42 = scmp.ne.s32.totalorder %s25, %s41
    %p43 = scmp.eq.s32.totalorder %s17, 0
    %p44 = por %p42, %p43
    %s46 = sadd.s32 %s45, 1
    %p49 = scmp.eq.s32.totalorder %s11, 3
    %p50 = scmp.ne.s32.totalorder %s45, %s47
    %p51 = scmp.eq.s32.totalorder %s11, 0
    %p52 = por %p50, %p51
    %p53 = scmp.ne.s32.totalorder %s45, %s47
    %p54 = scmp.eq.s32.totalorder %s16, 3
    %p55 = por %p53, %p54
    %p56 = scmp.ne.s32.totalorder %s47, %s48
    %p57 = scmp.eq.s32.totalorder %s16, 0
    %p58 = por %p56, %p57
    %p59 = scmp.ne.s32.totalorder %s47, %s48
    %p60 = scmp.eq.s32.totalorder %s17, 3
    %p61 = por %p59, %p60
    %p63 = scmp.ne.s32.totalorder %s48, %s62
    %p64 = scmp.eq.s32.totalorder %s17, 0
    %p65 = por %p63, %p64
    %s67 = sadd.s32 %s66, 1
    %p70 = scmp.eq.s32.totalorder %s11, 3
    %p71 = scmp.ne.s32.totalorder %s66, %s68
    %p72 = scmp.eq.s32.totalorder %s11, 0
    %p73 = por %p71, %p72
    %p74 = scmp.ne.s32.totalorder %s66, %s68
    %p75 = scmp.eq.s32.totalorder %s16, 3
    %p76 = por %p74, %p75
    %p77 = scmp.ne.s32.totalorder %s68, %s69
    %p78 = scmp.eq.s32.totalorder %s16, 0
    %p79 = por %p77, %p78
    %p80 = scmp.ne.s32.totalorder %s68, %s69
    %p81 = scmp.eq.s32.totalorder %s17, 3
    %p82 = por %p80, %p81
    %p84 = scmp.ne.s32.totalorder %s69, %s83
    %p85 = scmp.eq.s32.totalorder %s17, 0
    %p86 = por %p84, %p85
    %s88 = sadd.s32 %s87, 1
    %p91 = scmp.eq.s32.totalorder %s11, 3
    %p92 = scmp.ne.s32.totalorder %s87, %s89
    %p93 = scmp.eq.s32.totalorder %s11, 0
    %p94 = por %p92, %p93
    %p95 = scmp.ne.s32.totalorder %s87, %s89
    %p96 = scmp.eq.s32.totalorder %s16, 3
    %p97 = por %p95, %p96
    %p98 = scmp.ne.s32.totalorder %s89, %s90
    %p99 = scmp.eq.s32.totalorder %s16, 0
    %p100 = por %p98, %p99
    %p101 = scmp.ne.s32.totalorder %s89, %s90
    %p102 = scmp.eq.s32.totalorder %s17, 3
    %p103 = por %p101, %p102
    %p105 = scmp.ne.s32.totalorder %s90, %s104
    %p106 = scmp.eq.s32.totalorder %s17, 0
    %p107 = por %p105, %p106
    %s109 = sadd.s32 %s108, 1
    %p112 = scmp.eq.s32.totalorder %s11, 3
    %p113 = scmp.ne.s32.totalorder %s108, %s110
    %p114 = scmp.eq.s32.totalorder %s11, 0
    %p115 = por %p113, %p114
    %p116 = scmp.ne.s32.totalorder %s108, %s110
    %p117 = scmp.eq.s32.totalorder %s16, 3
    %p118 = por %p116, %p117
    %p119 = scmp.ne.s32.totalorder %s110, %s111
    %p120 = scmp.eq.s32.totalorder %s16, 0
    %p121 = por %p119, %p120
    %p122 = scmp.ne.s32.totalorder %s110, %s111
    %p123 = scmp.eq.s32.totalorder %s17, 3
    %p124 = por %p122, %p123
    %p126 = scmp.ne.s32.totalorder %s111, %s125
    %p127 = scmp.eq.s32.totalorder %s17, 0
    %p128 = por %p126, %p127
    %s129 = ssub.s32 %s11, %s18
    %p130 = scmp.eq.s32.totalorder %s129, 0
    %s132 = sadd.s32 %s131, 1
    %s133 = scalar_select %p130, %s131, %s132
    %p136 = pneg %p130
    %p137 = scmp.eq.s32.totalorder %s11, 3
    %p138 = por %p136, %p137
    %p139 = scmp.ne.s32.totalorder %s131, %s134
    %p140 = scmp.eq.s32.totalorder %s11, 0
    %p141 = por %p139, %p140
    %p142 = scmp.ne.s32.totalorder %s131, %s134
    %p143 = scmp.eq.s32.totalorder %s16, 3
    %p144 = por %p142, %p143
    %p145 = scmp.ne.s32.totalorder %s134, %s135
    %p146 = scmp.eq.s32.totalorder %s16, 0
    %p147 = por %p145, %p146
    %p148 = scmp.ne.s32.totalorder %s134, %s135
    %p149 = scmp.eq.s32.totalorder %s17, 3
    %p150 = por %p148, %p149
    %p152 = scmp.ne.s32.totalorder %s135, %s151
    %p153 = scmp.eq.s32.totalorder %s17, 0
    %p154 = por %p152, %p153
    %p155 = scmp.le.s32.totalorder 1, %s11
    %p156 = scmp.lt.s32.totalorder %s11, 5
    %p157 = pnand %p155, %p156
    %p158 = pneg %p157
    // Predicated region
    $region9: #{simple_nn_forward.1} parent=5 // pred_check
      _
    $region10: #{simple_nn_forward.1} parent=5 // pred_check_branch
      %160 = sbr.rel (%p157) target = $region12
    $region11: #{simple_nn_forward.1} parent=5 // pred_region
      %s161 = ssub.s32 %s11, 1
      // Predicated region
      $region13: #{simple_nn_forward.1} parent=11 // pred_check
        %p162 = pneg %p58
      $region14: #{simple_nn_forward.1} parent=11 // pred_check_branch
        %164 = sbr.rel (%p162) target = $region16
      $region15: #{simple_nn_forward.1} parent=11 // pred_region
        _
      $region16: #{simple_nn_forward.1} parent=11 // pred_fallthru
        _
      // Predicated region
      $region17: #{simple_nn_forward.1} parent=11 // pred_check
        %p165 = pneg %p79
      $region18: #{simple_nn_forward.1} parent=11 // pred_check_branch
        %167 = sbr.rel (%p165) target = $region20
      $region19: #{simple_nn_forward.1} parent=11 // pred_region
        _
      $region20: #{simple_nn_forward.1} parent=11 // pred_fallthru
        _
      // Predicated region
      $region21: #{simple_nn_forward.1} parent=11 // pred_check
        %p168 = pneg %p100
      $region22: #{simple_nn_forward.1} parent=11 // pred_check_branch
        %170 = sbr.rel (%p168) target = $region24
      $region23: #{simple_nn_forward.1} parent=11 // pred_region
        _
      $region24: #{simple_nn_forward.1} parent=11 // pred_fallthru
        _
      // Predicated region
      $region25: #{simple_nn_forward.1} parent=11 // pred_check
        %p171 = pneg %p121
      $region26: #{simple_nn_forward.1} parent=11 // pred_check_branch
        %173 = sbr.rel (%p171) target = $region28
      $region27: #{simple_nn_forward.1} parent=11 // pred_region
        _
      $region28: #{simple_nn_forward.1} parent=11 // pred_fallthru
        _
    $region12: #{simple_nn_forward.1} parent=5 // pred_fallthru
      _
    %p174 = scmp.lt.s32.totalorder %s11, 4
    // Predicated region
    $region29: #{simple_nn_forward.1} parent=5 // pred_check
      %p175 = pneg %p174
    $region30: #{simple_nn_forward.1} parent=5 // pred_check_branch
      %177 = sbr.rel (%p175) target = $region32
    $region31: #{simple_nn_forward.1} parent=5 // pred_region
      // Predicated region
      $region33: #{simple_nn_forward.1} parent=31 // pred_check
        %p178 = pneg %p31
      $region34: #{simple_nn_forward.1} parent=31 // pred_check_branch
        %180 = sbr.rel (%p178) target = $region36
      $region35: #{simple_nn_forward.1} parent=31 // pred_region
        %s181 = smul.u32 8, %s11
        %p182 = scmp.lt.s32.totalorder %s181, 31
        %s183 = scalar_select %p182, %s181, 31
        %s184 = smul.addr %s183, 8
        %s185 = scalar_lea.vmem %s0, %s184
        %s186 = smul.u32 8, %s11
      $region36: #{simple_nn_forward.1} parent=31 // pred_fallthru
        _
    $region32: #{simple_nn_forward.1} parent=5 // pred_fallthru
      _
    %p187 = scmp.le.s32.totalorder 1, %s11
    %p188 = scmp.lt.s32.totalorder %s11, 5
    %p189 = pnand %p187, %p188
    %p190 = pneg %p189
    // Predicated region
    $region37: #{simple_nn_forward.1} parent=5 // pred_check
      _
    $region38: #{simple_nn_forward.1} parent=5 // pred_check_branch
      %192 = sbr.rel (%p189) target = $region40
    $region39: #{simple_nn_forward.1} parent=5 // pred_region
      %s193 = ssub.s32 %s11, 1
      %s194 = smul.u32 8, %s16
      %p195 = scmp.lt.s32.totalorder %s194, 31
      %s196 = scalar_select %p195, %s194, 31
      %s197 = smul.addr %s196, 8
      %s198 = scalar_lea.vmem %s0, %s197
      %p199 = pneg %p37
      %p200 = pneg %p34
      %p201 = pneg %p58
      %p202 = pneg %p55
      %p203 = pneg %p79
      %p204 = pneg %p76
      %p205 = pneg %p100
      %p206 = pneg %p97
      %p207 = pneg %p121
      %p208 = pneg %p118
      %p209 = pneg %p147
      %p210 = pneg %p144
      %s211 = smul.u32 8, %s16
      %p212 = scmp.lt.s32.totalorder %s211, 31
      %s213 = scalar_select %p212, %s211, 31
      %s214 = smul.addr %s213, 8
      %s215 = scalar_lea.vmem %s5, %s214
      %s216 = smul.u32 8, %s16
      %p217 = scmp.lt.s32.totalorder %s216, 31
      %s218 = scalar_select %p217, %s216, 31
      %s219 = smul.addr %s218, 8
      %s220 = scalar_lea.vmem %s0, %s219
      %s221 = smul.u32 8, %s16
      %s222 = smul.u32 8, %s16
      %p223 = scmp.lt.s32.totalorder %s222, 31
      %s224 = scalar_select %p223, %s222, 31
      %s225 = smul.addr %s224, 8
      %s226 = scalar_lea.vmem %s5, %s225
      %s227 = smul.u32 8, %s16
      %v228 = vld [vmem:[%s220] sm:$0xff]
      %v229 = vld [vmem:[%s220 + $0x8] sm:$0xff]
      %v230 = vld [vmem:[%s220 + $0x10] sm:$0xff]
      %v231 = vld [vmem:[%s220 + $0x18] sm:$0xff]
      %v232 = vld [vmem:[%s220 + $0x20] sm:$0xff]
      %v233 = vld [vmem:[%s220 + $0x28] sm:$0xff]
      %v234 = vld [vmem:[%s220 + $0x30] sm:$0xff]
      %v235 = vld [vmem:[%s220 + $0x38] sm:$0xff]
      %v236 = vld [vmem:[%s1] sm:$0xff]
      %v237 = vld [vmem:[%s1 + $0x8] sm:$0xff]
      %v238 = vld [vmem:[%s1 + $0x10] sm:$0xff]
      %v239 = vld [vmem:[%s1 + $0x18] sm:$0xff]
      %v240 = vld [vmem:[%s2] sm:$0x1]
      %v242 = vlaneseq
      %v243 = vshrl.u32 %v242, 7
      %v244 = vsub.s32 0, %v243
      %v245 = vrot.slane %v240, %v244
      %vm247 = vcmask 261120
      %v249 = vsel %vm247, %v228, 0
      %v252 = vsel %vm247, %v229, 0
      %v255 = vsel %vm247, %v230, 0
      %v258 = vsel %vm247, %v231, 0
      %v261 = vsel %vm247, %v232, 0
      %v264 = vsel %vm247, %v233, 0
      %v267 = vsel %vm247, %v234, 0
      %v270 = vsel %vm247, %v235, 0
      %272 = vmatprep.subr.mxu0 0.0
      %273 = vmatpush1.msra.mxu0 %v236
      %274 = vmatprep.subr.mxu0 0.0
      %275 = vmatpush1.msra.mxu0 %v237
      %276 = vmatprep.subr.mxu0 0.0
      %277 = vmatpush1.msra.mxu0 %v238
      %278 = vmatprep.subr.mxu0 0.0
      %279 = vmatpush1.msra.mxu0 %v239
      %280 = vmatprep.subr.mxu0 0.0
      %281 = vmatpush1.msra.mxu0 0.0
      %282 = vmatprep.subr.mxu0 0.0
      %283 = vmatpush1.msra.mxu0 0.0
      %284 = vmatprep.subr.mxu0 0.0
      %285 = vmatpush1.msra.mxu0 0.0
      %286 = vmatprep.subr.mxu0 0.0
      %287 = vmatpush1.msra.mxu0 0.0
      %288 = vmatprep.subr.mxu0 0.0
      %289 = vmatpush1.msra.mxu0 0.0
      %290 = vmatprep.subr.mxu0 0.0
      %291 = vmatpush1.msra.mxu0 0.0
      %292 = vmatprep.subr.mxu0 0.0
      %293 = vmatpush1.msra.mxu0 0.0
      %294 = vmatprep.subr.mxu0 0.0
      %295 = vmatpush1.msra.mxu0 0.0
      %296 = vmatprep.subr.mxu0 0.0
      %297 = vmatpush1.msra.mxu0 0.0
      %298 = vmatprep.subr.mxu0 0.0
      %299 = vmatpush1.msra.mxu0 0.0
      %300 = vmatprep.subr.mxu0 0.0
      %301 = vmatpush1.msra.mxu0 0.0
      %302 = vmatprep.subr.mxu0 0.0
      %303 = vmatpush1.msra.mxu0 0.0
      %304 = vmatprep.subr.mxu0 0.0
      %305 = vmatpush1.msra.mxu0 0.0
      %306 = vmatprep.subr.mxu0 0.0
      %307 = vmatpush1.msra.mxu0 0.0
      %308 = vmatprep.subr.mxu0 0.0
      %309 = vmatpush1.msra.mxu0 0.0
      %310 = vmatprep.subr.mxu0 0.0
      %311 = vmatpush1.msra.mxu0 0.0
      %312 = vmatprep.subr.mxu0 0.0
      %313 = vmatpush1.msra.mxu0 0.0
      %314 = vmatprep.subr.mxu0 0.0
      %315 = vmatpush1.msra.mxu0 0.0
      %316 = vmatprep.subr.mxu0 0.0
      %317 = vmatpush1.msra.mxu0 0.0
      %318 = vmatprep.subr.mxu0 0.0
      %319 = vmatpush1.msra.mxu0 0.0
      %320 = vmatprep.subr.mxu0 0.0
      %321 = vmatpush1.msra.mxu0 0.0
      %322 = vmatprep.subr.mxu0 0.0
      %323 = vmatpush1.msra.mxu0 0.0
      %324 = vmatprep.subr.mxu0 0.0
      %325 = vmatpush1.msra.mxu0 0.0
      %326 = vmatprep.subr.mxu0 0.0
      %327 = vmatpush1.msra.mxu0 0.0
      %328 = vmatprep.subr.mxu0 0.0
      %329 = vmatpush1.msra.mxu0 0.0
      %330 = vmatprep.subr.mxu0 0.0
      %331 = vmatpush1.msra.mxu0 0.0
      %332 = vmatprep.subr.mxu0 0.0
      %333 = vmatpush1.msra.mxu0 0.0
      %334 = vmatprep.subr.mxu0 0.0
      %335 = vmatpush1.msra.mxu0 0.0
      %336 = vmatprep.mubr.f32.mxu0 0.0
      %337 = vmatmul.mubr.f32.gmra.mrb[0].mxu0 %v249
      %v338 = vpop.f32.mrb[0].mxu0
      %v339 = vadd.f32 %v245, %v338
      %v340 = vpop.f32.mrb[0].mxu0
      %341 = vmatprep.mubr.f32.mxu0 0.0
      %342 = vmatmul.mubr.f32.gmra.mrb[0].mxu0 %v252
      %v343 = vpop.f32.mrb[0].mxu0
      %v344 = vadd.f32 %v245, %v343
      %v345 = vpop.f32.mrb[0].mxu0
      %346 = vmatprep.mubr.f32.mxu0 0.0
      %347 = vmatmul.mubr.f32.gmra.mrb[0].mxu0 %v255
      %v348 = vpop.f32.mrb[0].mxu0
      %v349 = vadd.f32 %v245, %v348
      %v350 = vpop.f32.mrb[0].mxu0
      %351 = vmatprep.mubr.f32.mxu0 0.0
      %352 = vmatmul.mubr.f32.gmra.mrb[0].mxu0 %v258
      %v353 = vpop.f32.mrb[0].mxu0
      %v354 = vadd.f32 %v245, %v353
      %v355 = vpop.f32.mrb[0].mxu0
      %356 = vmatprep.mubr.f32.mxu0 0.0
      %357 = vmatmul.mubr.f32.gmra.mrb[0].mxu0 %v261
      %v358 = vpop.f32.mrb[0].mxu0
      %v359 = vadd.f32 %v245, %v358
      %v360 = vpop.f32.mrb[0].mxu0
      %361 = vmatprep.mubr.f32.mxu0 0.0
      %362 = vmatmul.mubr.f32.gmra.mrb[0].mxu0 %v264
      %v363 = vpop.f32.mrb[0].mxu0
      %v364 = vadd.f32 %v245, %v363
      %v365 = vpop.f32.mrb[0].mxu0
      %366 = vmatprep.mubr.f32.mxu0 0.0
      %367 = vmatmul.mubr.f32.gmra.mrb[0].mxu0 %v267
      %v368 = vpop.f32.mrb[0].mxu0
      %v369 = vadd.f32 %v245, %v368
      %v370 = vpop.f32.mrb[0].mxu0
      %371 = vmatprep.mubr.f32.mxu0 0.0
      %372 = vmatmul.mubr.f32.gmra.mrb[0].mxu0 %v270
      %v373 = vpop.f32.mrb[0].mxu0
      %v374 = vadd.f32 %v245, %v373
      %v375 = vpop.f32.mrb[0].mxu0
      %376 = vdwg.mxu0
      %v377 = vmax.f32 %v339, 0.0
      %v378 = vmax.f32 %v344, 0.0
      %v379 = vmax.f32 %v349, 0.0
      %v380 = vmax.f32 %v354, 0.0
      %v381 = vmax.f32 %v359, 0.0
      %v382 = vmax.f32 %v364, 0.0
      %v383 = vmax.f32 %v369, 0.0
      %v384 = vmax.f32 %v374, 0.0
      %v385 = vld [vmem:[%s3] sm:$0xff]
      %v386 = vld [vmem:[%s3 + $0x8] sm:$0xff]
      %v387 = vld [vmem:[%s3 + $0x10] sm:$0xff]
      %v388 = vld [vmem:[%s3 + $0x18] sm:$0xff]
      %v389 = vld [vmem:[%s3 + $0x20] sm:$0xff]
      %v390 = vld [vmem:[%s3 + $0x28] sm:$0xff]
      %v391 = vld [vmem:[%s3 + $0x30] sm:$0xff]
      %v392 = vld [vmem:[%s3 + $0x38] sm:$0xff]
      %v393 = vld [vmem:[%s3 + $0x40] sm:$0xff]
      %v394 = vld [vmem:[%s3 + $0x48] sm:$0xff]
      %v395 = vld [vmem:[%s3 + $0x50] sm:$0xff]
      %v396 = vld [vmem:[%s3 + $0x58] sm:$0xff]
      %v397 = vld [vmem:[%s3 + $0x60] sm:$0xff]
      %v398 = vld [vmem:[%s3 + $0x68] sm:$0xff]
      %v399 = vld [vmem:[%s3 + $0x70] sm:$0xff]
      %v400 = vld [vmem:[%s3 + $0x78] sm:$0xff]
      %v401 = vld [vmem:[%s4] sm:$0x1]
      %v403 = vlaneseq
      %v404 = vshrl.u32 %v403, 7
      %v405 = vsub.s32 0, %v404
      %v406 = vrot.slane %v401, %v405
      %408 = vmatprep.subr.mxu0 0.0
      %409 = vmatpush1.msra.mxu0 %v385
      %410 = vmatprep.subr.mxu0 0.0
      %411 = vmatpush1.msra.mxu0 %v386
      %412 = vmatprep.subr.mxu0 0.0
      %413 = vmatpush1.msra.mxu0 %v387
      %414 = vmatprep.subr.mxu0 0.0
      %415 = vmatpush1.msra.mxu0 %v388
      %416 = vmatprep.subr.mxu0 0.0
      %417 = vmatpush1.msra.mxu0 %v389
      %418 = vmatprep.subr.mxu0 0.0
      %419 = vmatpush1.msra.mxu0 %v390
      %420 = vmatprep.subr.mxu0 0.0
      %421 = vmatpush1.msra.mxu0 %v391
      %422 = vmatprep.subr.mxu0 0.0
      %423 = vmatpush1.msra.mxu0 %v392
      %424 = vmatprep.subr.mxu0 0.0
      %425 = vmatpush1.msra.mxu0 %v393
      %426 = vmatprep.subr.mxu0 0.0
      %427 = vmatpush1.msra.mxu0 %v394
      %428 = vmatprep.subr.mxu0 0.0
      %429 = vmatpush1.msra.mxu0 %v395
      %430 = vmatprep.subr.mxu0 0.0
      %431 = vmatpush1.msra.mxu0 %v396
      %432 = vmatprep.subr.mxu0 0.0
      %433 = vmatpush1.msra.mxu0 %v397
      %434 = vmatprep.subr.mxu0 0.0
      %435 = vmatpush1.msra.mxu0 %v398
      %436 = vmatprep.subr.mxu0 0.0
      %437 = vmatpush1.msra.mxu0 %v399
      %438 = vmatprep.subr.mxu0 0.0
      %439 = vmatpush1.msra.mxu0 %v400
      %440 = vmatprep.subr.mxu0 0.0
      %441 = vmatpush1.msra.mxu0 0.0
      %442 = vmatprep.subr.mxu0 0.0
      %443 = vmatpush1.msra.mxu0 0.0
      %444 = vmatprep.subr.mxu0 0.0
      %445 = vmatpush1.msra.mxu0 0.0
      %446 = vmatprep.subr.mxu0 0.0
      %447 = vmatpush1.msra.mxu0 0.0
      %448 = vmatprep.subr.mxu0 0.0
      %449 = vmatpush1.msra.mxu0 0.0
      %450 = vmatprep.subr.mxu0 0.0
      %451 = vmatpush1.msra.mxu0 0.0
      %452 = vmatprep.subr.mxu0 0.0
      %453 = vmatpush1.msra.mxu0 0.0
      %454 = vmatprep.subr.mxu0 0.0
      %455 = vmatpush1.msra.mxu0 0.0
      %456 = vmatprep.subr.mxu0 0.0
      %457 = vmatpush1.msra.mxu0 0.0
      %458 = vmatprep.subr.mxu0 0.0
      %459 = vmatpush1.msra.mxu0 0.0
      %460 = vmatprep.subr.mxu0 0.0
      %461 = vmatpush1.msra.mxu0 0.0
      %462 = vmatprep.subr.mxu0 0.0
      %463 = vmatpush1.msra.mxu0 0.0
      %464 = vmatprep.subr.mxu0 0.0
      %465 = vmatpush1.msra.mxu0 0.0
      %466 = vmatprep.subr.mxu0 0.0
      %467 = vmatpush1.msra.mxu0 0.0
      %468 = vmatprep.subr.mxu0 0.0
      %469 = vmatpush1.msra.mxu0 0.0
      %470 = vmatprep.subr.mxu0 0.0
      %471 = vmatpush1.msra.mxu0 0.0
      %472 = vmatprep.mubr.f32.mxu0 0.0
      %473 = vmatmul.mubr.f32.gmra.mrb[0].mxu0 %v377
      %v474 = vpop.f32.mrb[0].mxu0
      %v475 = vadd.f32 %v406, %v474
      %v476 = vpop.f32.mrb[0].mxu0
      %477 = vmatprep.mubr.f32.mxu0 0.0
      %478 = vmatmul.mubr.f32.gmra.mrb[0].mxu0 %v378
      %v479 = vpop.f32.mrb[0].mxu0
      %v480 = vadd.f32 %v406, %v479
      %v481 = vpop.f32.mrb[0].mxu0
      %482 = vmatprep.mubr.f32.mxu0 0.0
      %483 = vmatmul.mubr.f32.gmra.mrb[0].mxu0 %v379
      %v484 = vpop.f32.mrb[0].mxu0
      %v485 = vadd.f32 %v406, %v484
      %v486 = vpop.f32.mrb[0].mxu0
      %487 = vmatprep.mubr.f32.mxu0 0.0
      %488 = vmatmul.mubr.f32.gmra.mrb[0].mxu0 %v380
      %v489 = vpop.f32.mrb[0].mxu0
      %v490 = vadd.f32 %v406, %v489
      %v491 = vpop.f32.mrb[0].mxu0
      %492 = vmatprep.mubr.f32.mxu0 0.0
      %493 = vmatmul.mubr.f32.gmra.mrb[0].mxu0 %v381
      %v494 = vpop.f32.mrb[0].mxu0
      %v495 = vadd.f32 %v406, %v494
      %v496 = vpop.f32.mrb[0].mxu0
      %497 = vmatprep.mubr.f32.mxu0 0.0
      %498 = vmatmul.mubr.f32.gmra.mrb[0].mxu0 %v382
      %v499 = vpop.f32.mrb[0].mxu0
      %v500 = vadd.f32 %v406, %v499
      %v501 = vpop.f32.mrb[0].mxu0
      %502 = vmatprep.mubr.f32.mxu0 0.0
      %503 = vmatmul.mubr.f32.gmra.mrb[0].mxu0 %v383
      %v504 = vpop.f32.mrb[0].mxu0
      %v505 = vadd.f32 %v406, %v504
      %v506 = vpop.f32.mrb[0].mxu0
      %507 = vmatprep.mubr.f32.mxu0 0.0
      %508 = vmatmul.mubr.f32.gmra.mrb[0].mxu0 %v384
      %v509 = vpop.f32.mrb[0].mxu0
      %v510 = vadd.f32 %v406, %v509
      %v511 = vpop.f32.mrb[0].mxu0
      %512 = vdwg.mxu0
      %vm513 = vcmask 15360
      %514 = vst.msk [vmem:[%s226] sm:$0xff] %vm513, %v475
      %515 = vst.msk [vmem:[%s226 + $0x8] sm:$0xff] %vm513, %v480
      %516 = vst.msk [vmem:[%s226 + $0x10] sm:$0xff] %vm513, %v485
      %517 = vst.msk [vmem:[%s226 + $0x18] sm:$0xff] %vm513, %v490
      %518 = vst.msk [vmem:[%s226 + $0x20] sm:$0xff] %vm513, %v495
      %519 = vst.msk [vmem:[%s226 + $0x28] sm:$0xff] %vm513, %v500
      %520 = vst.msk [vmem:[%s226 + $0x30] sm:$0xff] %vm513, %v505
      %521 = vst.msk [vmem:[%s226 + $0x38] sm:$0xff] %vm513, %v510
      %s522 = smul.u32 8, %s16
      %p523 = scmp.lt.s32.totalorder %s522, 31
      %s524 = scalar_select %p523, %s522, 31
      %s525 = smul.addr %s524, 8
      %s526 = scalar_lea.vmem %s5, %s525
      // Predicated region
      $region41: #{simple_nn_forward.1} parent=39 // pred_check
        %p527 = pneg %p144
      $region42: #{simple_nn_forward.1} parent=39 // pred_check_branch
        %529 = sbr.rel (%p527) target = $region44
      $region43: #{simple_nn_forward.1} parent=39 // pred_region
        %s530 = smul.u32 8, %s16
      $region44: #{simple_nn_forward.1} parent=39 // pred_fallthru
        _
    $region40: #{simple_nn_forward.1} parent=5 // pred_fallthru
      _
    %p531 = scmp.le.s32.totalorder 2, %s11
    // Predicated region
    $region45: #{simple_nn_forward.1} parent=5 // pred_check
      %p532 = pneg %p531
    $region46: #{simple_nn_forward.1} parent=5 // pred_check_branch
      %534 = sbr.rel (%p532) target = $region48
    $region47: #{simple_nn_forward.1} parent=5 // pred_region
      %s535 = ssub.s32 %s11, 2
      // Predicated region
      $region49: #{simple_nn_forward.1} parent=47 // pred_check
        %p536 = pneg %p150
      $region50: #{simple_nn_forward.1} parent=47 // pred_check_branch
        %538 = sbr.rel (%p536) target = $region52
      $region51: #{simple_nn_forward.1} parent=47 // pred_region
        %s539 = smul.u32 8, %s17
        %p540 = scmp.lt.s32.totalorder %s539, 31
        %s541 = scalar_select %p540, %s539, 31
        %s542 = smul.addr %s541, 8
        %s543 = scalar_lea.vmem %s5, %s542
      $region52: #{simple_nn_forward.1} parent=47 // pred_fallthru
        _
    $region48: #{simple_nn_forward.1} parent=5 // pred_fallthru
      _
  $region6: #{simple_nn_forward.1} parent=0 // loop_footer
    %s15 = sadd.s32 1, %s11
  $region7: #{simple_nn_forward.1} parent=0 // loop_footer_branch
    %10 = sbr.rel target = $region3
  $region8: #{simple_nn_forward.1} parent=0 // loop_exit
    _

</llo_original>
